<compile_context>
chip_gen: v5e
topology: v5e:2x2
jax: 0.10.0
libtpu: 0.0.40
codegen_flags: <defaults>
</compile_context>

<pallas_src>
import jax
import jax.numpy as jnp
from jax.experimental import pallas as pl
from jax.experimental.pallas import tpu as pltpu


def _corr2d_kernel(w_ref, b_ref, x_ref, o_ref):
    # w_ref: SMEM (kh, kw) scalar taps
    # b_ref: SMEM (1,)     scalar bias
    # x_ref: VMEM (H, Wx)   Wx = W (unpacked) or G*W (lane-packed, mult of 128)
    # o_ref: VMEM (Ho, Wout) Wout = Wo (unpacked) or G*W (lane-packed)
    kh, kw = w_ref.shape
    ho, wo = o_ref.shape
    h, wx = x_ref.shape

    x = x_ref[...]  # one image-group, f32

    # Roll-based shifts (XLU) only when the minor dims are tile-aligned; the
    # lane-packed path is aligned by construction.  Otherwise fall back to the
    # (previously validated) slice path.
    use_roll = (wx % 128 == 0) and (h % 8 == 0)

    # Hoist the kw column shifts out of the tap loop: one shifted copy per
    # kernel column, reused for every kernel row.
    if use_roll:
        # roll(x, Wx - j) puts column c+j at position c (jnp.roll semantics);
        # wrapped columns land at c >= Wx - j, i.e. per-image columns
        # >= W - j >= Wo, which never reach valid output.
        cols = [x] + [pltpu.roll(x, shift=wx - j, axis=1) for j in range(1, kw)]
    else:
        # Misaligned lane slices force a relayout copy per column offset; only
        # taken for un-packed narrow images (overhead-dominated anyway).
        cols = [x[:, j:j + wo] for j in range(kw)]

    # Bias folded into the accumulator init (no epilogue add).
    acc = jnp.full((ho, wo), b_ref[0], dtype=jnp.float32)

    # Static unrolled tap loop: each tap is one VPU multiply-accumulate scaled
    # by an SMEM scalar; row shifts are XLU sublane rotations (wrapped rows
    # land at r >= H - i >= Ho, discarded).
    for i in range(kh):
        for j in range(kw):
            c = cols[j]
            if i == 0:
                win = c[:ho, :wo]
            elif use_roll:
                win = pltpu.roll(c, shift=h - i, axis=0)[:ho, :wo]
            else:
                win = c[i:i + ho, :wo]
            acc = acc + win * w_ref[i, j]

    o_ref[...] = acc


def _lane_pack_factor(B, H, W):
    """Largest G dividing B with G*W a multiple of 128 (and G <= 128//W).

    Packing G small images side-by-side along the lane axis makes the minor
    dim exactly 128-dense (unmasked vst, no padded HBM bytes).  Returns 1 when
    no clean packing exists (then the natural-width path is used).
    """
    if W >= 128 or H % 8 != 0:
        return 1
    g = 1
    for cand in range(2, 128 // W + 1):
        if B % cand == 0 and (cand * W) % 128 == 0:
            g = cand
    return g


def conv2d_forward_batched(x, weight, bias):
    """Cross-correlation + scalar bias for a batch of 2D images.

    x: (B, H, W), weight: (kh, kw), bias: (1,)
    returns (B, H - kh + 1, W - kw + 1) float32
    """
    B, H, W = x.shape
    kh, kw = weight.shape
    assert H >= kh and W >= kw, "image smaller than kernel"
    Ho, Wo = H - kh + 1, W - kw + 1

    G = _lane_pack_factor(B, H, W)
    Bg = B // G
    Wl = G * W

    xk = x.astype(jnp.float32)
    if G > 1:
        # (B,H,W) -> (Bg,H,G*W): image g of a group occupies lane columns
        # [g*W, (g+1)*W).  Pure layout plumbing in the wrapper.
        xk = jnp.transpose(xk.reshape(Bg, G, H, W), (0, 2, 1, 3)).reshape(Bg, H, Wl)
        out_w = Wl          # lane-dense output; junk columns dropped on unpack
    else:
        out_w = Wo          # natural width, no padding, no post-slice

    # Bytes the call actually DMAs (input + output blocks + SMEM params).
    cost = pl.CostEstimate(
        flops=2 * B * Ho * Wo * kh * kw,
        transcendentals=0,
        bytes_accessed=4 * (Bg * H * Wl + Bg * Ho * out_w + kh * kw + 1),
    )

    out = pl.pallas_call(
        _corr2d_kernel,
        out_shape=jax.ShapeDtypeStruct((Bg, Ho, out_w), jnp.float32),
        grid=(Bg,),
        in_specs=[
            pl.BlockSpec((kh, kw), lambda b: (0, 0),
                         memory_space=pltpu.MemorySpace.SMEM),   # weight taps
            pl.BlockSpec((1,), lambda b: (0,),
                         memory_space=pltpu.MemorySpace.SMEM),   # scalar bias
            # One image-group per grid step (Squeezed leading dim => 2-D refs,
            # small vreg live set); last two dims equal the full array dims so
            # natural widths are always legal.
            pl.BlockSpec((pl.Squeezed(), H, Wl), lambda b: (b, 0, 0)),
        ],
        out_specs=pl.BlockSpec((pl.Squeezed(), Ho, out_w), lambda b: (b, 0, 0)),
        compiler_params=pltpu.CompilerParams(
            dimension_semantics=("parallel",)),
        cost_estimate=cost,
    )(weight.astype(jnp.float32), bias.astype(jnp.float32), xk)

    if G > 1:
        # Un-pack: keep the valid Wo columns of each image segment.
        out = out.reshape(Bg, Ho, G, W)[:, :, :, :Wo]
        out = jnp.transpose(out, (0, 2, 1, 3)).reshape(B, Ho, Wo)
    return out


def conv2d_forward(x, weight, bias):
    """Matches Conv2D.forward: accepts a single (H, W) image or a (B, H, W) batch."""
    if x.ndim == 2:
        return conv2d_forward_batched(x[None], weight, bias)[0]
    return conv2d_forward_batched(x, weight, bias)


def corr2d_reference(x, k):
    """Pure-JAX reference matching the PyTorch corr2d semantics (one image)."""
    kh, kw = k.shape
    ho, wo = x.shape[0] - kh + 1, x.shape[1] - kw + 1
    out = jnp.zeros((ho, wo), jnp.float32)
    for i in range(kh):
        for j in range(kw):
            out = out + x[i:i + ho, j:j + wo] * k[i, j]
    return out


if __name__ == "__main__":
    key = jax.random.PRNGKey(0)
    k_x, k_w = jax.random.split(key)

    B, H, W = 8, 16, 16
    kernel_size = (3, 3)

    # Parameters mirroring the module (weight ~ U[0,1); bias is a scalar —
    # nonzero here so the bias fold is actually exercised).
    weight = jax.random.uniform(k_w, kernel_size, dtype=jnp.float32)
    bias = jnp.full((1,), 0.25, dtype=jnp.float32)

    # Batch of 2D images (the module is applied per image).
    x = jax.random.normal(k_x, (B, H, W), dtype=jnp.float32)

    out = jax.block_until_ready(conv2d_forward(x, weight, bias))

    Ho, Wo = H - kernel_size[0] + 1, W - kernel_size[1] + 1
    assert out.shape == (B, Ho, Wo)

    ref = jnp.stack([corr2d_reference(x[b], weight) for b in range(B)]) + bias[0]
    assert jnp.allclose(out, ref, atol=1e-5, rtol=1e-5), float(
        jnp.max(jnp.abs(out - ref)))

    # Module-exact forward signature (single 2D image => un-packed slice path).
    out1 = jax.block_until_ready(conv2d_forward(x[0], weight, bias))
    assert out1.shape == (Ho, Wo)
    assert jnp.allclose(out1, ref[0], atol=1e-5, rtol=1e-5)

    print("KERNEL_OK")
</pallas_src>

<mosaic_0001>
module attributes {stable_mosaic.version = 11 : i64} {
  func.func @_corr2d_kernel(%arg0: i32, %arg1: memref<3x3xf32, #tpu.memory_space<smem>>, %arg2: memref<1xf32, #tpu.memory_space<smem>>, %arg3: memref<1x16x128xf32, #tpu.memory_space<vmem>>, %arg4: memref<1x14x128xf32, #tpu.memory_space<vmem>>) attributes {dimension_semantics = [#tpu.dimension_semantics<parallel>], iteration_bounds = array<i64: 1>, scalar_prefetch = 0 : i64, scratch_operands = 0 : i64, tpu.core_type = #tpu.core_type<tc>, window_params = [{transform_indices = @transform_0, window_bounds = array<i64: 3, 3>}, {transform_indices = @transform_1, window_bounds = array<i64: 1>}, {transform_indices = @transform_2, window_bounds = array<i64: 1, 16, 128>}, {transform_indices = @transform_3, window_bounds = array<i64: 1, 14, 128>}]} {
    %c0 = arith.constant 0 : index
    %c0_0 = arith.constant 0 : index
    %c0_1 = arith.constant 0 : index
    %0 = vector.load %arg3[%c0, %c0_0, %c0_1] : memref<1x16x128xf32, #tpu.memory_space<vmem>>, vector<1x16x128xf32>
    %1 = vector.shape_cast %0 : vector<1x16x128xf32> to vector<16x128xf32>
    %c127_i32 = arith.constant 127 : i32
    %2 = tpu.dynamic_rotate %1 by %c127_i32 dim 1 : vector<16x128xf32>, i32 -> vector<16x128xf32>
    %c126_i32 = arith.constant 126 : i32
    %3 = tpu.dynamic_rotate %1 by %c126_i32 dim 1 : vector<16x128xf32>, i32 -> vector<16x128xf32>
    %c0_2 = arith.constant 0 : index
    %4 = memref.load %arg2[%c0_2] : memref<1xf32, #tpu.memory_space<smem>>
    %5 = vector.broadcast %4 : f32 to vector<14x128xf32>
    %6 = vector.extract_strided_slice %1 {offsets = [0, 0], sizes = [14, 128], strides = [1, 1]} : vector<16x128xf32> to vector<14x128xf32>
    %c0_3 = arith.constant 0 : index
    %c0_4 = arith.constant 0 : index
    %7 = memref.load %arg1[%c0_3, %c0_4] : memref<3x3xf32, #tpu.memory_space<smem>>
    %8 = vector.broadcast %7 : f32 to vector<14x128xf32>
    %9 = arith.mulf %6, %8 : vector<14x128xf32>
    %10 = arith.addf %5, %9 : vector<14x128xf32>
    %11 = vector.extract_strided_slice %2 {offsets = [0, 0], sizes = [14, 128], strides = [1, 1]} : vector<16x128xf32> to vector<14x128xf32>
    %c0_5 = arith.constant 0 : index
    %c1 = arith.constant 1 : index
    %12 = memref.load %arg1[%c0_5, %c1] : memref<3x3xf32, #tpu.memory_space<smem>>
    %13 = vector.broadcast %12 : f32 to vector<14x128xf32>
    %14 = arith.mulf %11, %13 : vector<14x128xf32>
    %15 = arith.addf %10, %14 : vector<14x128xf32>
    %16 = vector.extract_strided_slice %3 {offsets = [0, 0], sizes = [14, 128], strides = [1, 1]} : vector<16x128xf32> to vector<14x128xf32>
    %c0_6 = arith.constant 0 : index
    %c2 = arith.constant 2 : index
    %17 = memref.load %arg1[%c0_6, %c2] : memref<3x3xf32, #tpu.memory_space<smem>>
    %18 = vector.broadcast %17 : f32 to vector<14x128xf32>
    %19 = arith.mulf %16, %18 : vector<14x128xf32>
    %20 = arith.addf %15, %19 : vector<14x128xf32>
    %c15_i32 = arith.constant 15 : i32
    %21 = tpu.dynamic_rotate %1 by %c15_i32 dim 0 : vector<16x128xf32>, i32 -> vector<16x128xf32>
    %22 = vector.extract_strided_slice %21 {offsets = [0, 0], sizes = [14, 128], strides = [1, 1]} : vector<16x128xf32> to vector<14x128xf32>
    %c1_7 = arith.constant 1 : index
    %c0_8 = arith.constant 0 : index
    %23 = memref.load %arg1[%c1_7, %c0_8] : memref<3x3xf32, #tpu.memory_space<smem>>
    %24 = vector.broadcast %23 : f32 to vector<14x128xf32>
    %25 = arith.mulf %22, %24 : vector<14x128xf32>
    %26 = arith.addf %20, %25 : vector<14x128xf32>
    %c15_i32_9 = arith.constant 15 : i32
    %27 = tpu.dynamic_rotate %2 by %c15_i32_9 dim 0 : vector<16x128xf32>, i32 -> vector<16x128xf32>
    %28 = vector.extract_strided_slice %27 {offsets = [0, 0], sizes = [14, 128], strides = [1, 1]} : vector<16x128xf32> to vector<14x128xf32>
    %c1_10 = arith.constant 1 : index
    %c1_11 = arith.constant 1 : index
    %29 = memref.load %arg1[%c1_10, %c1_11] : memref<3x3xf32, #tpu.memory_space<smem>>
    %30 = vector.broadcast %29 : f32 to vector<14x128xf32>
    %31 = arith.mulf %28, %30 : vector<14x128xf32>
    %32 = arith.addf %26, %31 : vector<14x128xf32>
    %c15_i32_12 = arith.constant 15 : i32
    %33 = tpu.dynamic_rotate %3 by %c15_i32_12 dim 0 : vector<16x128xf32>, i32 -> vector<16x128xf32>
    %34 = vector.extract_strided_slice %33 {offsets = [0, 0], sizes = [14, 128], strides = [1, 1]} : vector<16x128xf32> to vector<14x128xf32>
    %c1_13 = arith.constant 1 : index
    %c2_14 = arith.constant 2 : index
    %35 = memref.load %arg1[%c1_13, %c2_14] : memref<3x3xf32, #tpu.memory_space<smem>>
    %36 = vector.broadcast %35 : f32 to vector<14x128xf32>
    %37 = arith.mulf %34, %36 : vector<14x128xf32>
    %38 = arith.addf %32, %37 : vector<14x128xf32>
    %c14_i32 = arith.constant 14 : i32
    %39 = tpu.dynamic_rotate %1 by %c14_i32 dim 0 : vector<16x128xf32>, i32 -> vector<16x128xf32>
    %40 = vector.extract_strided_slice %39 {offsets = [0, 0], sizes = [14, 128], strides = [1, 1]} : vector<16x128xf32> to vector<14x128xf32>
    %c2_15 = arith.constant 2 : index
    %c0_16 = arith.constant 0 : index
    %41 = memref.load %arg1[%c2_15, %c0_16] : memref<3x3xf32, #tpu.memory_space<smem>>
    %42 = vector.broadcast %41 : f32 to vector<14x128xf32>
    %43 = arith.mulf %40, %42 : vector<14x128xf32>
    %44 = arith.addf %38, %43 : vector<14x128xf32>
    %c14_i32_17 = arith.constant 14 : i32
    %45 = tpu.dynamic_rotate %2 by %c14_i32_17 dim 0 : vector<16x128xf32>, i32 -> vector<16x128xf32>
    %46 = vector.extract_strided_slice %45 {offsets = [0, 0], sizes = [14, 128], strides = [1, 1]} : vector<16x128xf32> to vector<14x128xf32>
    %c2_18 = arith.constant 2 : index
    %c1_19 = arith.constant 1 : index
    %47 = memref.load %arg1[%c2_18, %c1_19] : memref<3x3xf32, #tpu.memory_space<smem>>
    %48 = vector.broadcast %47 : f32 to vector<14x128xf32>
    %49 = arith.mulf %46, %48 : vector<14x128xf32>
    %50 = arith.addf %44, %49 : vector<14x128xf32>
    %c14_i32_20 = arith.constant 14 : i32
    %51 = tpu.dynamic_rotate %3 by %c14_i32_20 dim 0 : vector<16x128xf32>, i32 -> vector<16x128xf32>
    %52 = vector.extract_strided_slice %51 {offsets = [0, 0], sizes = [14, 128], strides = [1, 1]} : vector<16x128xf32> to vector<14x128xf32>
    %c2_21 = arith.constant 2 : index
    %c2_22 = arith.constant 2 : index
    %53 = memref.load %arg1[%c2_21, %c2_22] : memref<3x3xf32, #tpu.memory_space<smem>>
    %54 = vector.broadcast %53 : f32 to vector<14x128xf32>
    %55 = arith.mulf %52, %54 : vector<14x128xf32>
    %56 = arith.addf %50, %55 : vector<14x128xf32>
    %c0_23 = arith.constant 0 : index
    %c0_24 = arith.constant 0 : index
    %c0_25 = arith.constant 0 : index
    %57 = vector.load %arg4[%c0_23, %c0_24, %c0_25] : memref<1x14x128xf32, #tpu.memory_space<vmem>>, vector<1x14x128xf32>
    %58 = vector.shape_cast %57 : vector<1x14x128xf32> to vector<14x128xf32>
    %59 = vector.shape_cast %56 : vector<14x128xf32> to vector<1x14x128xf32>
    tpu.vector_store %arg4[%c0_23, %c0_24, %c0_25], %59 {strides = array<i32>} : memref<1x14x128xf32, #tpu.memory_space<vmem>>, vector<1x14x128xf32>,
    return
  }
  func.func @transform_0(%arg0: i32) -> (i32, i32) {
    %c0_i32 = arith.constant 0 : i32
    %c0_i32_0 = arith.constant 0 : i32
    %c0_i32_1 = arith.constant 0 : i32
    return %c0_i32, %c0_i32_0 : i32, i32
  }
  func.func @transform_1(%arg0: i32) -> i32 {
    %c0_i32 = arith.constant 0 : i32
    %c0_i32_0 = arith.constant 0 : i32
    return %c0_i32 : i32
  }
  func.func @transform_2(%arg0: i32) -> (i32, i32, i32) {
    %c0_i32 = arith.constant 0 : i32
    %c0_i32_0 = arith.constant 0 : i32
    %c0_i32_1 = arith.constant 0 : i32
    return %arg0, %c0_i32, %c0_i32_0 : i32, i32, i32
  }
  func.func @transform_3(%arg0: i32) -> (i32, i32, i32) {
    %c0_i32 = arith.constant 0 : i32
    %c0_i32_0 = arith.constant 0 : i32
    %c0_i32_1 = arith.constant 0 : i32
    return %arg0, %c0_i32, %c0_i32_0 : i32, i32, i32
  }
}

</mosaic_0001>

<llo_original>
// kernel: tpu_custom_call.1
$region0: #{tpu_custom_call.1}
  #allocation0 [shape = 'u32[]', space=smem, size = 0x4, offset = 0x4, fixed_abs, tag = 'smem constant byte address 0x4 - core index']
  #allocation1 [shape = 'u32[72,128]{1,0:T(1,128)}', space=vmem, size = 0x9000, scoped, tag = 'internal scratch']
  #allocation2 [shape = 'f32[1]{0:T(128)S(6)}', space=smem, size = 0x200, scoped, tag = 'scoped memory for tpu_custom_call.1']
  %s0 = inlined_call_operand.hbm [shape: f32[3,3], index: 0, kind: input, shape index: {}]
  %s1 = inlined_call_operand.<no memory space> [shape: f32[1], index: 1, kind: input, shape index: {}]
  %s2 = inlined_call_operand.hbm [shape: f32[1,16,128], index: 2, kind: input, shape index: {}]
  %s3 = inlined_call_operand.vmem [shape: f32[1,14,128], index: 3, kind: output, shape index: {}]
  %s4 = sld [smem:[#allocation0]]
  $region30: #{tpu_custom_call.1} parent=0
    _
  %s6 = ssub.s32 1, %s4
  %s7 = scalar_select 0, %s6, %s4
  %8 = sst [smem:[#allocation2]] %s1
  $region1: #{tpu_custom_call.1} parent=0
    #allocation3 [shape = 'u8[2048]{0}', space=smem, size = 0x800, scoped, tag = 'input window, operand 0, single buffered']
    #allocation4 [shape = 's32[1]{0}', space=sflag, size = 0x4, scoped, tag = 'scoped memory for tpu_custom_call.1']
    #allocation5 [shape = 's32[1]{0}', space=sflag, size = 0x4, scoped, tag = 'scoped memory for tpu_custom_call.1']
    #allocation6 [shape = 'u8[8192]{0}', space=vmem, size = 0x2000, scoped, tag = 'input window, operand 2, single buffered']
    %9 = vsyncpa [#allocation5], 0
    %10 = vsyncpa [#allocation4], 0
    // Predicated region
    $region2: #{tpu_custom_call.1} parent=1 // pred_check
      _
    $region3: #{tpu_custom_call.1} parent=1 // pred_check_branch
      %12 = sbr.rel (0) target = $region5
    $region4: #{tpu_custom_call.1} parent=1 // pred_region
      %14 = vsyncadd [#allocation5], 0
      %s16 = sshll.u32 %s0, 4
      %s17 = int_to_ptr.hbm [resolvable:$true] %s16
      %19 = dma.hbm_to_smem %s17, 64, [#allocation3], [#allocation5]
    $region5: #{tpu_custom_call.1} parent=1 // pred_fallthru
      _
    // Predicated region
    $region6: #{tpu_custom_call.1} parent=1 // pred_check
      _
    $region7: #{tpu_custom_call.1} parent=1 // pred_check_branch
      %21 = sbr.rel (0) target = $region9
    $region8: #{tpu_custom_call.1} parent=1 // pred_region
      _
    $region9: #{tpu_custom_call.1} parent=1 // pred_fallthru
      _
    // Predicated region
    $region10: #{tpu_custom_call.1} parent=1 // pred_check
      _
    $region11: #{tpu_custom_call.1} parent=1 // pred_check_branch
      %23 = sbr.rel (0) target = $region13
    $region12: #{tpu_custom_call.1} parent=1 // pred_region
      %25 = vsyncadd [#allocation4], 0
      %s26 = sshll.u32 %s2, 4
      %s27 = int_to_ptr.hbm [resolvable:$true] %s26
      %s28 = sshll.u32 [#allocation6], 4
      %s29 = int_to_ptr.vmem [resolvable:$true] %s28
      %34 = dma.hbm_to_vmem [thread:$0]  %s27, 256, %s29, [#allocation4], 128, 128, 8
    $region13: #{tpu_custom_call.1} parent=1 // pred_fallthru
      _
    // Predicated region
    $region14: #{tpu_custom_call.1} parent=1 // pred_check
      _
    $region15: #{tpu_custom_call.1} parent=1 // pred_check_branch
      %36 = sbr.rel (0) target = $region17
    $region16: #{tpu_custom_call.1} parent=1 // pred_region
      %38 = dma.done [#allocation5], 64
    $region17: #{tpu_custom_call.1} parent=1 // pred_fallthru
      _
    // Predicated region
    $region18: #{tpu_custom_call.1} parent=1 // pred_check
      _
    $region19: #{tpu_custom_call.1} parent=1 // pred_check_branch
      %40 = sbr.rel (0) target = $region21
    $region20: #{tpu_custom_call.1} parent=1 // pred_region
      %42 = dma.done [#allocation4], 256
    $region21: #{tpu_custom_call.1} parent=1 // pred_fallthru
      _
    %43 = sfence
    %v44 = vld [vmem:[#allocation6] sm:$0xff]
    %v45 = vld [vmem:[#allocation6 + $0x8] sm:$0xff]
    %46 = vrot.lane.b32.xlu0 %v44, 127
    %v47 = vpop.permute.xlu0 %46
    %48 = vrot.lane.b32.xlu0 %v45, 127
    %v49 = vpop.permute.xlu0 %48
    %50 = vrot.lane.b32.xlu0 %v44, 126
    %v51 = vpop.permute.xlu0 %50
    %52 = vrot.lane.b32.xlu0 %v45, 126
    %v53 = vpop.permute.xlu0 %52
    %s54 = sld [smem:[#allocation2]]
    %v55 = vstv %s54
    %s56 = sld [smem:[#allocation3]]
    %v57 = vstv %s56
    %v58 = vmul.f32 %v44, %v57
    %v59 = vmul.f32 %v45, %v57
    %v60 = vadd.f32 %v55, %v58
    %v61 = vadd.f32 %v55, %v59
    %s62 = sld [smem:[#allocation3 + $0x1]]
    %v63 = vstv %s62
    %v64 = vmul.f32 %v47, %v63
    %v65 = vmul.f32 %v49, %v63
    %v66 = vadd.f32 %v60, %v64
    %v67 = vadd.f32 %v61, %v65
    %s68 = sld [smem:[#allocation3 + $0x2]]
    %v69 = vstv %s68
    %v70 = vmul.f32 %v51, %v69
    %v71 = vmul.f32 %v53, %v69
    %v72 = vadd.f32 %v66, %v70
    %v73 = vadd.f32 %v67, %v71
    %v74 = vrot.slane %v44, 1
    %v75 = vrot.slane %v45, 1
    %v76 = vlaneseq
    %v77 = vshrl.u32 %v76, 7
    %vm78 = vcmp.lt.s32.totalorder %v77, 7
    %v79 = vsel %vm78, %v74, %v75
    %v80 = vsel %vm78, %v75, %v74
    %s81 = sld [smem:[#allocation3 + $0x80]]
    %v82 = vstv %s81
    %v83 = vmul.f32 %v79, %v82
    %v84 = vmul.f32 %v80, %v82
    %v85 = vadd.f32 %v72, %v83
    %v86 = vadd.f32 %v73, %v84
    %v87 = vrot.slane %v47, 1
    %v88 = vrot.slane %v49, 1
    %v89 = vsel %vm78, %v87, %v88
    %v90 = vsel %vm78, %v88, %v87
    %s91 = sld [smem:[#allocation3 + $0x81]]
    %v92 = vstv %s91
    %v93 = vmul.f32 %v89, %v92
    %v94 = vmul.f32 %v90, %v92
    %v95 = vadd.f32 %v85, %v93
    %v96 = vadd.f32 %v86, %v94
    %v97 = vrot.slane %v51, 1
    %v98 = vrot.slane %v53, 1
    %v99 = vsel %vm78, %v97, %v98
    %v100 = vsel %vm78, %v98, %v97
    %s101 = sld [smem:[#allocation3 + $0x82]]
    %v102 = vstv %s101
    %v103 = vmul.f32 %v99, %v102
    %v104 = vmul.f32 %v100, %v102
    %v105 = vadd.f32 %v95, %v103
    %v106 = vadd.f32 %v96, %v104
    %v107 = vrot.slane %v44, 2
    %v108 = vrot.slane %v45, 2
    %vm109 = vcmp.lt.s32.totalorder %v77, 6
    %v110 = vsel %vm109, %v107, %v108
    %v111 = vsel %vm109, %v108, %v107
    %s112 = sld [smem:[#allocation3 + $0x100]]
    %v113 = vstv %s112
    %v114 = vmul.f32 %v110, %v113
    %v115 = vmul.f32 %v111, %v113
    %v116 = vadd.f32 %v105, %v114
    %v117 = vadd.f32 %v106, %v115
    %v118 = vrot.slane %v47, 2
    %v119 = vrot.slane %v49, 2
    %v120 = vsel %vm109, %v118, %v119
    %v121 = vsel %vm109, %v119, %v118
    %s122 = sld [smem:[#allocation3 + $0x101]]
    %v123 = vstv %s122
    %v124 = vmul.f32 %v120, %v123
    %v125 = vmul.f32 %v121, %v123
    %v126 = vadd.f32 %v116, %v124
    %v127 = vadd.f32 %v117, %v125
    %v128 = vrot.slane %v51, 2
    %v129 = vrot.slane %v53, 2
    %v130 = vsel %vm109, %v128, %v129
    %v131 = vsel %vm109, %v129, %v128
    %s132 = sld [smem:[#allocation3 + $0x102]]
    %v133 = vstv %s132
    %v134 = vmul.f32 %v130, %v133
    %v135 = vmul.f32 %v131, %v133
    %v136 = vadd.f32 %v126, %v134
    %v137 = vadd.f32 %v127, %v135
    %138 = vst [vmem:[%s3] sm:$0xff] %v136
    %139 = vst [vmem:[%s3 + $0x8] sm:$0x3f] %v137
    // Predicated region
    $region22: #{tpu_custom_call.1} parent=1 // pred_check
      _
    $region23: #{tpu_custom_call.1} parent=1 // pred_check_branch
      %141 = sbr.rel (0) target = $region25
    $region24: #{tpu_custom_call.1} parent=1 // pred_region
      _
    $region25: #{tpu_custom_call.1} parent=1 // pred_fallthru
      _
    // Predicated region
    $region26: #{tpu_custom_call.1} parent=1 // pred_check
      _
    $region27: #{tpu_custom_call.1} parent=1 // pred_check_branch
      %143 = sbr.rel (0) target = $region29
    $region28: #{tpu_custom_call.1} parent=1 // pred_region
      _
    $region29: #{tpu_custom_call.1} parent=1 // pred_fallthru
      _
    %144 = vsyncpa [#allocation4], 1
    %145 = vsyncpa [#allocation5], 1

</llo_original>
